<compile_context>
chip_gen: v6e
topology: v6e:2x2x1
jax: 0.10.0
libtpu: 0.0.40
codegen_flags: <defaults>
</compile_context>

<pallas_src>
import jax
import jax.numpy as jnp
from jax.experimental import pallas as pl
from jax.experimental.pallas import tpu as pltpu

_LANE = 128      # lane (fast, last-dim) tile unit
_SUBLANE = 8     # sublane (second-to-last) tile unit
_VMEM_TILE_BUDGET = 28 * 1024 * 1024  # conservative; fits every generation


def _round_up(x: int, m: int) -> int:
    return ((x + m - 1) // m) * m


def _mm_kernel(a_ref, b_ref, o_ref):
    # Single-shot MXU matmul over the full contraction (K fits in one tile:
    # no accumulator scratch, no K grid axis).
    o_ref[...] = jnp.dot(
        a_ref[...], b_ref[...], preferred_element_type=jnp.float32
    ).astype(o_ref.dtype)


def matrix_factorization_forward(peptide_factors, run_factors, *,
                                 tm=512, tn=None, compute_dtype=None):
    """Reconstruct the matrix: peptide_factors @ run_factors via Pallas."""
    M, K = peptide_factors.shape
    K2, N = run_factors.shape
    if K != K2:
        raise ValueError("inner dimensions must match")

    out_dtype = peptide_factors.dtype
    a, b = peptide_factors, run_factors
    if compute_dtype is not None:
        # bf16 inputs + f32 accumulation: MXU-native fast path.
        a = a.astype(compute_dtype)
        b = b.astype(compute_dtype)
    in_bytes = jnp.dtype(a.dtype).itemsize
    out_bytes = jnp.dtype(out_dtype).itemsize

    # ---- tile selection -----------------------------------------------------
    # M -> sublane-tiled rows.
    if M <= tm:
        tm = _round_up(max(M, _SUBLANE), _SUBLANE)
    M_pad = _round_up(M, tm)

    # N -> lane axis; keep output rows lane-dense.
    N_pad = _round_up(max(N, _LANE), _LANE)

    def _fits(tn_):
        # Double-buffered A, B and O tiles (B is re-used when its block index
        # is constant, but budget 2x anyway to stay safe on every chip).
        return 2 * (tm * K * in_bytes + K * tn_ * in_bytes
                    + tm * tn_ * out_bytes) <= _VMEM_TILE_BUDGET

    if tn is None:
        # Prefer the full padded run axis: one resident run_factors block,
        # widest possible unmasked stores.
        tn = N_pad if _fits(N_pad) else 512
    tn = _round_up(min(tn, N_pad), _LANE)
    N_pad = _round_up(N_pad, tn)

    # ---- zero-pad to tile multiples (zeros don't change the product) --------
    if M_pad != M:
        a = jnp.pad(a, ((0, M_pad - M), (0, 0)))
    if N_pad != N:
        b = jnp.pad(b, ((0, 0), (0, N_pad - N)))

    grid = (M_pad // tm, N_pad // tn)

    footprint = 2 * (tm * K * in_bytes + K * tn * in_bytes + tm * tn * out_bytes)
    vmem_limit = min(max(footprint + (4 << 20), 32 << 20), 56 << 20)

    cost = pl.CostEstimate(
        flops=2 * M_pad * N_pad * K,
        transcendentals=0,
        bytes_accessed=in_bytes * (M_pad * K + K * N_pad) + out_bytes * M_pad * N_pad,
    )

    out = pl.pallas_call(
        _mm_kernel,
        out_shape=jax.ShapeDtypeStruct((M_pad, N_pad), out_dtype),
        grid=grid,
        in_specs=[
            pl.BlockSpec((tm, K), lambda i, j: (i, 0)),   # A tile streams along M
            pl.BlockSpec((K, tn), lambda i, j: (0, j)),   # B constant across M sweep
        ],
        out_specs=pl.BlockSpec((tm, tn), lambda i, j: (i, j)),
        compiler_params=pltpu.CompilerParams(
            dimension_semantics=("parallel", "parallel"),
            vmem_limit_bytes=vmem_limit,
        ),
        cost_estimate=cost,
    )(a, b)

    if (M_pad, N_pad) != (M, N):
        out = out[:M, :N]
    return out


if __name__ == "__main__":
    # Small, deterministic "model" parameters (shapes as in the nn.Module).
    # TODO(synk): parameter init uses jax.random.normal rather than torch's RNG
    # seeded via numpy; only the forward pass (torch.mm) is reproduced.
    n_peptides = 256   # M
    n_runs = 256       # N
    n_factors = 128    # K (latent factors)

    key = jax.random.PRNGKey(0)
    k_pep, k_run = jax.random.split(key)
    peptide_factors = jax.random.normal(k_pep, (n_peptides, n_factors), dtype=jnp.float32)
    run_factors = jax.random.normal(k_run, (n_factors, n_runs), dtype=jnp.float32)

    ref = peptide_factors @ run_factors

    # f32 path: bit-for-bit the module's semantics.
    out = jax.block_until_ready(
        matrix_factorization_forward(peptide_factors, run_factors)
    )
    assert out.shape == (n_peptides, n_runs)
    assert jnp.allclose(out, ref, atol=1e-4, rtol=1e-4), "f32 mismatch vs reference"

    # bf16-input fast path (MXU-native; f32 accumulation) — looser tolerance.
    out_bf16 = jax.block_until_ready(
        matrix_factorization_forward(peptide_factors, run_factors,
                                     compute_dtype=jnp.bfloat16)
    )
    assert jnp.allclose(out_bf16, ref, atol=1.0, rtol=5e-2), "bf16 mismatch vs reference"

    # Awkward, non-tile-multiple shapes exercise the padding path.
    pf2 = jax.random.normal(jax.random.PRNGKey(1), (1000, 16), dtype=jnp.float32)
    rf2 = jax.random.normal(jax.random.PRNGKey(2), (16, 37), dtype=jnp.float32)
    out2 = jax.block_until_ready(matrix_factorization_forward(pf2, rf2))
    assert out2.shape == (1000, 37)
    assert jnp.allclose(out2, pf2 @ rf2, atol=1e-4, rtol=1e-4), "padded-shape mismatch"

    print("KERNEL_OK")
</pallas_src>

<mosaic_0001>
module attributes {stable_mosaic.version = 11 : i64} {
  func.func @_mm_kernel(%arg0: i32, %arg1: i32, %arg2: memref<256x128xf32, #tpu.memory_space<vmem>>, %arg3: memref<128x256xf32, #tpu.memory_space<vmem>>, %arg4: memref<256x256xf32, #tpu.memory_space<vmem>>) attributes {dimension_semantics = [#tpu.dimension_semantics<parallel>, #tpu.dimension_semantics<parallel>], iteration_bounds = array<i64: 1, 1>, scalar_prefetch = 0 : i64, scratch_operands = 0 : i64, tpu.core_type = #tpu.core_type<tc>, window_params = [{transform_indices = @transform_0, window_bounds = array<i64: 256, 128>}, {transform_indices = @transform_1, window_bounds = array<i64: 128, 256>}, {transform_indices = @transform_2, window_bounds = array<i64: 256, 256>}]} {
    %c0 = arith.constant 0 : index
    %c0_0 = arith.constant 0 : index
    %0 = vector.load %arg2[%c0, %c0_0] : memref<256x128xf32, #tpu.memory_space<vmem>>, vector<256x128xf32>
    %c0_1 = arith.constant 0 : index
    %c0_2 = arith.constant 0 : index
    %1 = vector.load %arg3[%c0_1, %c0_2] : memref<128x256xf32, #tpu.memory_space<vmem>>, vector<128x256xf32>
    %cst = arith.constant dense<0.000000e+00> : vector<256x256xf32>
    %2 = tpu.matmul %0, %1, %cst {dimension_numbers = #tpu.dot_dimension_numbers<[1], [0], [0], [1], [0, 0, 1, 1], [], []>} : vector<256x128xf32>, vector<128x256xf32>, vector<256x256xf32> -> vector<256x256xf32>
    %c0_3 = arith.constant 0 : index
    %c0_4 = arith.constant 0 : index
    %3 = vector.load %arg4[%c0_3, %c0_4] : memref<256x256xf32, #tpu.memory_space<vmem>>, vector<256x256xf32>
    tpu.vector_store %arg4[%c0_3, %c0_4], %2 {strides = array<i32>} : memref<256x256xf32, #tpu.memory_space<vmem>>, vector<256x256xf32>,
    return
  }
  func.func @transform_0(%arg0: i32, %arg1: i32) -> (i32, i32) {
    %c0_i32 = arith.constant 0 : i32
    %c0_i32_0 = arith.constant 0 : i32
    return %arg0, %c0_i32 : i32, i32
  }
  func.func @transform_1(%arg0: i32, %arg1: i32) -> (i32, i32) {
    %c0_i32 = arith.constant 0 : i32
    %c0_i32_0 = arith.constant 0 : i32
    return %c0_i32, %arg1 : i32, i32
  }
  func.func @transform_2(%arg0: i32, %arg1: i32) -> (i32, i32) {
    %c0_i32 = arith.constant 0 : i32
    return %arg0, %arg1 : i32, i32
  }
}

</mosaic_0001>

<llo_original>
// kernel: tpu_custom_call.1
$region0: #{tpu_custom_call.1}
  #allocation0 [shape = 'u32[]', space=smem, size = 0x4, offset = 0x4, fixed_abs, tag = 'smem constant byte address 0x4 - core index']
  #allocation1 [shape = 'u32[144,128]{1,0:T(1,128)}', space=vmem, size = 0x12000, scoped, tag = 'internal scratch']
  %s0 = inlined_call_operand.hbm [shape: f32[256,128], index: 0, kind: input, shape index: {}]
  %s1 = inlined_call_operand.hbm [shape: f32[128,256], index: 1, kind: input, shape index: {}]
  %s2 = inlined_call_operand.hbm [shape: f32[256,256], index: 2, kind: output, shape index: {}]
  %s3 = sld [smem:[#allocation0]]
  $region26: #{tpu_custom_call.1} parent=0
    _
  %s5 = ssub.s32 1, %s3
  %s6 = scalar_select 0, %s5, %s3
  $region1: #{tpu_custom_call.1} parent=0
    #allocation2 [shape = 'u8[131072]{0}', space=vmem, size = 0x20000, scoped, tag = 'input window, operand 0, single buffered']
    #allocation3 [shape = 's32[1]{0}', space=sflag, size = 0x4, scoped, tag = 'scoped memory for tpu_custom_call.1']
    #allocation4 [shape = 's32[1]{0}', space=sflag, size = 0x4, scoped, tag = 'scoped memory for tpu_custom_call.1']
    #allocation5 [shape = 'u8[131072]{0}', space=vmem, size = 0x20000, scoped, tag = 'input window, operand 1, single buffered']
    #allocation6 [shape = 's32[1]{0}', space=sflag, size = 0x4, scoped, tag = 'scoped memory for tpu_custom_call.1']
    #allocation7 [shape = 'u8[262144]{0}', space=vmem, size = 0x40000, scoped, tag = 'output window, operand 0, single buffered']
    %7 = vsyncpa [#allocation3], 0
    %8 = vsyncpa [#allocation6], 0
    %9 = vsyncpa [#allocation4], 0
    // Predicated region
    $region2: #{tpu_custom_call.1} parent=1 // pred_check
      _
    $region3: #{tpu_custom_call.1} parent=1 // pred_check_branch
      %11 = sbr.rel (0) target = $region5
    $region4: #{tpu_custom_call.1} parent=1 // pred_region
      %s13 = ssub.s32 4096, 4096
      %14 = vsyncadd [#allocation3], %s13
      %s15 = sshll.u32 [#allocation2], 4
      %s16 = int_to_ptr.vmem [resolvable:$true] %s15
      %21 = dma.hbm_to_vmem [thread:$0]  %s0, 4096, %s16, [#allocation3], 128, 128, 8
    $region5: #{tpu_custom_call.1} parent=1 // pred_fallthru
      _
    // Predicated region
    $region6: #{tpu_custom_call.1} parent=1 // pred_check
      _
    $region7: #{tpu_custom_call.1} parent=1 // pred_check_branch
      %23 = sbr.rel (0) target = $region9
    $region8: #{tpu_custom_call.1} parent=1 // pred_region
      %s25 = ssub.s32 4096, 4096
      %26 = vsyncadd [#allocation6], %s25
      %s27 = sshll.u32 [#allocation5], 4
      %s28 = int_to_ptr.vmem [resolvable:$true] %s27
      %33 = dma.hbm_to_vmem [thread:$0]  %s1, 4096, %s28, [#allocation6], 256, 256, 16
    $region9: #{tpu_custom_call.1} parent=1 // pred_fallthru
      _
    // Predicated region
    $region10: #{tpu_custom_call.1} parent=1 // pred_check
      _
    $region11: #{tpu_custom_call.1} parent=1 // pred_check_branch
      %35 = sbr.rel (0) target = $region13
    $region12: #{tpu_custom_call.1} parent=1 // pred_region
      %36 = dma.done [#allocation3], 4096
    $region13: #{tpu_custom_call.1} parent=1 // pred_fallthru
      _
    // Predicated region
    $region14: #{tpu_custom_call.1} parent=1 // pred_check
      _
    $region15: #{tpu_custom_call.1} parent=1 // pred_check_branch
      %38 = sbr.rel (0) target = $region17
    $region16: #{tpu_custom_call.1} parent=1 // pred_region
      %39 = dma.done [#allocation6], 4096
    $region17: #{tpu_custom_call.1} parent=1 // pred_fallthru
      _
    %v40 = vld [vmem:[#allocation2] sm:$0xff]
    %v41 = vld [vmem:[#allocation2 + $0x8] sm:$0xff]
    %v42 = vld [vmem:[#allocation2 + $0x10] sm:$0xff]
    %v43 = vld [vmem:[#allocation2 + $0x18] sm:$0xff]
    %v44 = vld [vmem:[#allocation2 + $0x20] sm:$0xff]
    %v45 = vld [vmem:[#allocation2 + $0x28] sm:$0xff]
    %v46 = vld [vmem:[#allocation2 + $0x30] sm:$0xff]
    %v47 = vld [vmem:[#allocation2 + $0x38] sm:$0xff]
    %v48 = vld [vmem:[#allocation2 + $0x40] sm:$0xff]
    %v49 = vld [vmem:[#allocation2 + $0x48] sm:$0xff]
    %v50 = vld [vmem:[#allocation2 + $0x50] sm:$0xff]
    %v51 = vld [vmem:[#allocation2 + $0x58] sm:$0xff]
    %v52 = vld [vmem:[#allocation2 + $0x60] sm:$0xff]
    %v53 = vld [vmem:[#allocation2 + $0x68] sm:$0xff]
    %v54 = vld [vmem:[#allocation2 + $0x70] sm:$0xff]
    %v55 = vld [vmem:[#allocation2 + $0x78] sm:$0xff]
    %v56 = vld [vmem:[#allocation2 + $0x80] sm:$0xff]
    %v57 = vld [vmem:[#allocation2 + $0x88] sm:$0xff]
    %v58 = vld [vmem:[#allocation2 + $0x90] sm:$0xff]
    %v59 = vld [vmem:[#allocation2 + $0x98] sm:$0xff]
    %v60 = vld [vmem:[#allocation2 + $0xa0] sm:$0xff]
    %v61 = vld [vmem:[#allocation2 + $0xa8] sm:$0xff]
    %v62 = vld [vmem:[#allocation2 + $0xb0] sm:$0xff]
    %v63 = vld [vmem:[#allocation2 + $0xb8] sm:$0xff]
    %v64 = vld [vmem:[#allocation2 + $0xc0] sm:$0xff]
    %v65 = vld [vmem:[#allocation2 + $0xc8] sm:$0xff]
    %v66 = vld [vmem:[#allocation2 + $0xd0] sm:$0xff]
    %v67 = vld [vmem:[#allocation2 + $0xd8] sm:$0xff]
    %v68 = vld [vmem:[#allocation2 + $0xe0] sm:$0xff]
    %v69 = vld [vmem:[#allocation2 + $0xe8] sm:$0xff]
    %v70 = vld [vmem:[#allocation2 + $0xf0] sm:$0xff]
    %v71 = vld [vmem:[#allocation2 + $0xf8] sm:$0xff]
    %v72 = vld [vmem:[#allocation5] sm:$0xff]
    %v73 = vld [vmem:[#allocation5 + $0x8] sm:$0xff]
    %v74 = vld [vmem:[#allocation5 + $0x10] sm:$0xff]
    %v75 = vld [vmem:[#allocation5 + $0x18] sm:$0xff]
    %v76 = vld [vmem:[#allocation5 + $0x20] sm:$0xff]
    %v77 = vld [vmem:[#allocation5 + $0x28] sm:$0xff]
    %v78 = vld [vmem:[#allocation5 + $0x30] sm:$0xff]
    %v79 = vld [vmem:[#allocation5 + $0x38] sm:$0xff]
    %v80 = vld [vmem:[#allocation5 + $0x40] sm:$0xff]
    %v81 = vld [vmem:[#allocation5 + $0x48] sm:$0xff]
    %v82 = vld [vmem:[#allocation5 + $0x50] sm:$0xff]
    %v83 = vld [vmem:[#allocation5 + $0x58] sm:$0xff]
    %v84 = vld [vmem:[#allocation5 + $0x60] sm:$0xff]
    %v85 = vld [vmem:[#allocation5 + $0x68] sm:$0xff]
    %v86 = vld [vmem:[#allocation5 + $0x70] sm:$0xff]
    %v87 = vld [vmem:[#allocation5 + $0x78] sm:$0xff]
    %v88 = vld [vmem:[#allocation5 + $0x80] sm:$0xff]
    %v89 = vld [vmem:[#allocation5 + $0x88] sm:$0xff]
    %v90 = vld [vmem:[#allocation5 + $0x90] sm:$0xff]
    %v91 = vld [vmem:[#allocation5 + $0x98] sm:$0xff]
    %v92 = vld [vmem:[#allocation5 + $0xa0] sm:$0xff]
    %v93 = vld [vmem:[#allocation5 + $0xa8] sm:$0xff]
    %v94 = vld [vmem:[#allocation5 + $0xb0] sm:$0xff]
    %v95 = vld [vmem:[#allocation5 + $0xb8] sm:$0xff]
    %v96 = vld [vmem:[#allocation5 + $0xc0] sm:$0xff]
    %v97 = vld [vmem:[#allocation5 + $0xc8] sm:$0xff]
    %v98 = vld [vmem:[#allocation5 + $0xd0] sm:$0xff]
    %v99 = vld [vmem:[#allocation5 + $0xd8] sm:$0xff]
    %v100 = vld [vmem:[#allocation5 + $0xe0] sm:$0xff]
    %v101 = vld [vmem:[#allocation5 + $0xe8] sm:$0xff]
    %v102 = vld [vmem:[#allocation5 + $0xf0] sm:$0xff]
    %v103 = vld [vmem:[#allocation5 + $0xf8] sm:$0xff]
    %104 = vmatprep.subr.mxu0 %v103
    %105 = vmatpush1.msra.mxu0 %v102
    %106 = vmatprep.subr.mxu0 %v101
    %107 = vmatpush1.msra.mxu0 %v100
    %108 = vmatprep.subr.mxu0 %v99
    %109 = vmatpush1.msra.mxu0 %v98
    %110 = vmatprep.subr.mxu0 %v97
    %111 = vmatpush1.msra.mxu0 %v96
    %112 = vmatprep.subr.mxu0 %v95
    %113 = vmatpush1.msra.mxu0 %v94
    %114 = vmatprep.subr.mxu0 %v93
    %115 = vmatpush1.msra.mxu0 %v92
    %116 = vmatprep.subr.mxu0 %v91
    %117 = vmatpush1.msra.mxu0 %v90
    %118 = vmatprep.subr.mxu0 %v89
    %119 = vmatpush1.msra.mxu0 %v88
    %120 = vmatprep.subr.mxu0 %v87
    %121 = vmatpush1.msra.mxu0 %v86
    %122 = vmatprep.subr.mxu0 %v85
    %123 = vmatpush1.msra.mxu0 %v84
    %124 = vmatprep.subr.mxu0 %v83
    %125 = vmatpush1.msra.mxu0 %v82
    %126 = vmatprep.subr.mxu0 %v81
    %127 = vmatpush1.msra.mxu0 %v80
    %128 = vmatprep.subr.mxu0 %v79
    %129 = vmatpush1.msra.mxu0 %v78
    %130 = vmatprep.subr.mxu0 %v77
    %131 = vmatpush1.msra.mxu0 %v76
    %132 = vmatprep.subr.mxu0 %v75
    %133 = vmatpush1.msra.mxu0 %v74
    %134 = vmatprep.subr.mxu0 %v73
    %135 = vmatpush1.msra.mxu0 %v72
    %136 = vmatprep.subr.mxu0 0.0
    %137 = vmatpush2.msra.mxu0 0.0
    %138 = vmatprep.subr.mxu0 0.0
    %139 = vmatpush2.msra.mxu0 0.0
    %140 = vmatprep.subr.mxu0 0.0
    %141 = vmatpush2.msra.mxu0 0.0
    %142 = vmatprep.subr.mxu0 0.0
    %143 = vmatpush2.msra.mxu0 0.0
    %144 = vmatprep.subr.mxu0 0.0
    %145 = vmatpush2.msra.mxu0 0.0
    %146 = vmatprep.subr.mxu0 0.0
    %147 = vmatpush2.msra.mxu0 0.0
    %148 = vmatprep.subr.mxu0 0.0
    %149 = vmatpush2.msra.mxu0 0.0
    %150 = vmatprep.subr.mxu0 0.0
    %151 = vmatpush2.msra.mxu0 0.0
    %152 = vmatprep.subr.mxu0 0.0
    %153 = vmatpush2.msra.mxu0 0.0
    %154 = vmatprep.subr.mxu0 0.0
    %155 = vmatpush2.msra.mxu0 0.0
    %156 = vmatprep.subr.mxu0 0.0
    %157 = vmatpush2.msra.mxu0 0.0
    %158 = vmatprep.subr.mxu0 0.0
    %159 = vmatpush2.msra.mxu0 0.0
    %160 = vmatprep.subr.mxu0 0.0
    %161 = vmatpush2.msra.mxu0 0.0
    %162 = vmatprep.subr.mxu0 0.0
    %163 = vmatpush2.msra.mxu0 0.0
    %164 = vmatprep.subr.mxu0 0.0
    %165 = vmatpush2.msra.mxu0 0.0
    %166 = vmatprep.subr.mxu0 0.0
    %167 = vmatpush2.msra.mxu0 0.0
    %168 = vmatprep.mubr.f32.mxu0 0.0
    %169 = vmatmul.mubr.f32.gmra.mxu0 %v40
    %v170 = vpop.f32.mrf.mxu0
    %v171 = vadd.f32 0.0, %v170
    %v172 = vpop.f32.mrf.mxu0
    %v173 = vadd.f32 0.0, %v172
    %174 = vmatprep.mubr.f32.mxu0 0.0
    %175 = vmatmul.mubr.f32.gmra.mxu0 %v41
    %v176 = vpop.f32.mrf.mxu0
    %v177 = vadd.f32 0.0, %v176
    %v178 = vpop.f32.mrf.mxu0
    %v179 = vadd.f32 0.0, %v178
    %180 = vmatprep.mubr.f32.mxu0 0.0
    %181 = vmatmul.mubr.f32.gmra.mxu0 %v42
    %v182 = vpop.f32.mrf.mxu0
    %v183 = vadd.f32 0.0, %v182
    %v184 = vpop.f32.mrf.mxu0
    %v185 = vadd.f32 0.0, %v184
    %186 = vmatprep.mubr.f32.mxu0 0.0
    %187 = vmatmul.mubr.f32.gmra.mxu0 %v43
    %v188 = vpop.f32.mrf.mxu0
    %v189 = vadd.f32 0.0, %v188
    %v190 = vpop.f32.mrf.mxu0
    %v191 = vadd.f32 0.0, %v190
    %192 = vmatprep.mubr.f32.mxu0 0.0
    %193 = vmatmul.mubr.f32.gmra.mxu0 %v44
    %v194 = vpop.f32.mrf.mxu0
    %v195 = vadd.f32 0.0, %v194
    %v196 = vpop.f32.mrf.mxu0
    %v197 = vadd.f32 0.0, %v196
    %198 = vmatprep.mubr.f32.mxu0 0.0
    %199 = vmatmul.mubr.f32.gmra.mxu0 %v45
    %v200 = vpop.f32.mrf.mxu0
    %v201 = vadd.f32 0.0, %v200
    %v202 = vpop.f32.mrf.mxu0
    %v203 = vadd.f32 0.0, %v202
    %204 = vmatprep.mubr.f32.mxu0 0.0
    %205 = vmatmul.mubr.f32.gmra.mxu0 %v46
    %v206 = vpop.f32.mrf.mxu0
    %v207 = vadd.f32 0.0, %v206
    %v208 = vpop.f32.mrf.mxu0
    %v209 = vadd.f32 0.0, %v208
    %210 = vmatprep.mubr.f32.mxu0 0.0
    %211 = vmatmul.mubr.f32.gmra.mxu0 %v47
    %v212 = vpop.f32.mrf.mxu0
    %v213 = vadd.f32 0.0, %v212
    %v214 = vpop.f32.mrf.mxu0
    %v215 = vadd.f32 0.0, %v214
    %216 = vmatprep.mubr.f32.mxu0 0.0
    %217 = vmatmul.mubr.f32.gmra.mxu0 %v48
    %v218 = vpop.f32.mrf.mxu0
    %v219 = vadd.f32 0.0, %v218
    %v220 = vpop.f32.mrf.mxu0
    %v221 = vadd.f32 0.0, %v220
    %222 = vmatprep.mubr.f32.mxu0 0.0
    %223 = vmatmul.mubr.f32.gmra.mxu0 %v49
    %v224 = vpop.f32.mrf.mxu0
    %v225 = vadd.f32 0.0, %v224
    %v226 = vpop.f32.mrf.mxu0
    %v227 = vadd.f32 0.0, %v226
    %228 = vmatprep.mubr.f32.mxu0 0.0
    %229 = vmatmul.mubr.f32.gmra.mxu0 %v50
    %v230 = vpop.f32.mrf.mxu0
    %v231 = vadd.f32 0.0, %v230
    %v232 = vpop.f32.mrf.mxu0
    %v233 = vadd.f32 0.0, %v232
    %234 = vmatprep.mubr.f32.mxu0 0.0
    %235 = vmatmul.mubr.f32.gmra.mxu0 %v51
    %v236 = vpop.f32.mrf.mxu0
    %v237 = vadd.f32 0.0, %v236
    %v238 = vpop.f32.mrf.mxu0
    %v239 = vadd.f32 0.0, %v238
    %240 = vmatprep.mubr.f32.mxu0 0.0
    %241 = vmatmul.mubr.f32.gmra.mxu0 %v52
    %v242 = vpop.f32.mrf.mxu0
    %v243 = vadd.f32 0.0, %v242
    %v244 = vpop.f32.mrf.mxu0
    %v245 = vadd.f32 0.0, %v244
    %246 = vmatprep.mubr.f32.mxu0 0.0
    %247 = vmatmul.mubr.f32.gmra.mxu0 %v53
    %v248 = vpop.f32.mrf.mxu0
    %v249 = vadd.f32 0.0, %v248
    %v250 = vpop.f32.mrf.mxu0
    %v251 = vadd.f32 0.0, %v250
    %252 = vmatprep.mubr.f32.mxu0 0.0
    %253 = vmatmul.mubr.f32.gmra.mxu0 %v54
    %v254 = vpop.f32.mrf.mxu0
    %v255 = vadd.f32 0.0, %v254
    %v256 = vpop.f32.mrf.mxu0
    %v257 = vadd.f32 0.0, %v256
    %258 = vmatprep.mubr.f32.mxu0 0.0
    %259 = vmatmul.mubr.f32.gmra.mxu0 %v55
    %v260 = vpop.f32.mrf.mxu0
    %v261 = vadd.f32 0.0, %v260
    %v262 = vpop.f32.mrf.mxu0
    %v263 = vadd.f32 0.0, %v262
    %264 = vmatprep.mubr.f32.mxu0 0.0
    %265 = vmatmul.mubr.f32.gmra.mxu0 %v56
    %v266 = vpop.f32.mrf.mxu0
    %v267 = vadd.f32 0.0, %v266
    %v268 = vpop.f32.mrf.mxu0
    %v269 = vadd.f32 0.0, %v268
    %270 = vmatprep.mubr.f32.mxu0 0.0
    %271 = vmatmul.mubr.f32.gmra.mxu0 %v57
    %v272 = vpop.f32.mrf.mxu0
    %v273 = vadd.f32 0.0, %v272
    %v274 = vpop.f32.mrf.mxu0
    %v275 = vadd.f32 0.0, %v274
    %276 = vmatprep.mubr.f32.mxu0 0.0
    %277 = vmatmul.mubr.f32.gmra.mxu0 %v58
    %v278 = vpop.f32.mrf.mxu0
    %v279 = vadd.f32 0.0, %v278
    %v280 = vpop.f32.mrf.mxu0
    %v281 = vadd.f32 0.0, %v280
    %282 = vmatprep.mubr.f32.mxu0 0.0
    %283 = vmatmul.mubr.f32.gmra.mxu0 %v59
    %v284 = vpop.f32.mrf.mxu0
    %v285 = vadd.f32 0.0, %v284
    %v286 = vpop.f32.mrf.mxu0
    %v287 = vadd.f32 0.0, %v286
    %288 = vmatprep.mubr.f32.mxu0 0.0
    %289 = vmatmul.mubr.f32.gmra.mxu0 %v60
    %v290 = vpop.f32.mrf.mxu0
    %v291 = vadd.f32 0.0, %v290
    %v292 = vpop.f32.mrf.mxu0
    %v293 = vadd.f32 0.0, %v292
    %294 = vmatprep.mubr.f32.mxu0 0.0
    %295 = vmatmul.mubr.f32.gmra.mxu0 %v61
    %v296 = vpop.f32.mrf.mxu0
    %v297 = vadd.f32 0.0, %v296
    %v298 = vpop.f32.mrf.mxu0
    %v299 = vadd.f32 0.0, %v298
    %300 = vmatprep.mubr.f32.mxu0 0.0
    %301 = vmatmul.mubr.f32.gmra.mxu0 %v62
    %v302 = vpop.f32.mrf.mxu0
    %v303 = vadd.f32 0.0, %v302
    %v304 = vpop.f32.mrf.mxu0
    %v305 = vadd.f32 0.0, %v304
    %306 = vmatprep.mubr.f32.mxu0 0.0
    %307 = vmatmul.mubr.f32.gmra.mxu0 %v63
    %v308 = vpop.f32.mrf.mxu0
    %v309 = vadd.f32 0.0, %v308
    %v310 = vpop.f32.mrf.mxu0
    %v311 = vadd.f32 0.0, %v310
    %312 = vmatprep.mubr.f32.mxu0 0.0
    %313 = vmatmul.mubr.f32.gmra.mxu0 %v64
    %v314 = vpop.f32.mrf.mxu0
    %v315 = vadd.f32 0.0, %v314
    %v316 = vpop.f32.mrf.mxu0
    %v317 = vadd.f32 0.0, %v316
    %318 = vmatprep.mubr.f32.mxu0 0.0
    %319 = vmatmul.mubr.f32.gmra.mxu0 %v65
    %v320 = vpop.f32.mrf.mxu0
    %v321 = vadd.f32 0.0, %v320
    %v322 = vpop.f32.mrf.mxu0
    %v323 = vadd.f32 0.0, %v322
    %324 = vmatprep.mubr.f32.mxu0 0.0
    %325 = vmatmul.mubr.f32.gmra.mxu0 %v66
    %v326 = vpop.f32.mrf.mxu0
    %v327 = vadd.f32 0.0, %v326
    %v328 = vpop.f32.mrf.mxu0
    %v329 = vadd.f32 0.0, %v328
    %330 = vmatprep.mubr.f32.mxu0 0.0
    %331 = vmatmul.mubr.f32.gmra.mxu0 %v67
    %v332 = vpop.f32.mrf.mxu0
    %v333 = vadd.f32 0.0, %v332
    %v334 = vpop.f32.mrf.mxu0
    %v335 = vadd.f32 0.0, %v334
    %336 = vmatprep.mubr.f32.mxu0 0.0
    %337 = vmatmul.mubr.f32.gmra.mxu0 %v68
    %v338 = vpop.f32.mrf.mxu0
    %v339 = vadd.f32 0.0, %v338
    %v340 = vpop.f32.mrf.mxu0
    %v341 = vadd.f32 0.0, %v340
    %342 = vmatprep.mubr.f32.mxu0 0.0
    %343 = vmatmul.mubr.f32.gmra.mxu0 %v69
    %v344 = vpop.f32.mrf.mxu0
    %v345 = vadd.f32 0.0, %v344
    %v346 = vpop.f32.mrf.mxu0
    %v347 = vadd.f32 0.0, %v346
    %348 = vmatprep.mubr.f32.mxu0 0.0
    %349 = vmatmul.mubr.f32.gmra.mxu0 %v70
    %v350 = vpop.f32.mrf.mxu0
    %v351 = vadd.f32 0.0, %v350
    %v352 = vpop.f32.mrf.mxu0
    %v353 = vadd.f32 0.0, %v352
    %354 = vmatprep.mubr.f32.mxu0 0.0
    %355 = vmatmul.mubr.f32.gmra.mxu0 %v71
    %v356 = vpop.f32.mrf.mxu0
    %v357 = vadd.f32 0.0, %v356
    %v358 = vpop.f32.mrf.mxu0
    %v359 = vadd.f32 0.0, %v358
    %360 = vdwg.mxu0
    %361 = vst [vmem:[#allocation7] sm:$0xff] %v171
    %362 = vst [vmem:[#allocation7 + $0x8] sm:$0xff] %v173
    %363 = vst [vmem:[#allocation7 + $0x10] sm:$0xff] %v177
    %364 = vst [vmem:[#allocation7 + $0x18] sm:$0xff] %v179
    %365 = vst [vmem:[#allocation7 + $0x20] sm:$0xff] %v183
    %366 = vst [vmem:[#allocation7 + $0x28] sm:$0xff] %v185
    %367 = vst [vmem:[#allocation7 + $0x30] sm:$0xff] %v189
    %368 = vst [vmem:[#allocation7 + $0x38] sm:$0xff] %v191
    %369 = vst [vmem:[#allocation7 + $0x40] sm:$0xff] %v195
    %370 = vst [vmem:[#allocation7 + $0x48] sm:$0xff] %v197
    %371 = vst [vmem:[#allocation7 + $0x50] sm:$0xff] %v201
    %372 = vst [vmem:[#allocation7 + $0x58] sm:$0xff] %v203
    %373 = vst [vmem:[#allocation7 + $0x60] sm:$0xff] %v207
    %374 = vst [vmem:[#allocation7 + $0x68] sm:$0xff] %v209
    %375 = vst [vmem:[#allocation7 + $0x70] sm:$0xff] %v213
    %376 = vst [vmem:[#allocation7 + $0x78] sm:$0xff] %v215
    %377 = vst [vmem:[#allocation7 + $0x80] sm:$0xff] %v219
    %378 = vst [vmem:[#allocation7 + $0x88] sm:$0xff] %v221
    %379 = vst [vmem:[#allocation7 + $0x90] sm:$0xff] %v225
    %380 = vst [vmem:[#allocation7 + $0x98] sm:$0xff] %v227
    %381 = vst [vmem:[#allocation7 + $0xa0] sm:$0xff] %v231
    %382 = vst [vmem:[#allocation7 + $0xa8] sm:$0xff] %v233
    %383 = vst [vmem:[#allocation7 + $0xb0] sm:$0xff] %v237
    %384 = vst [vmem:[#allocation7 + $0xb8] sm:$0xff] %v239
    %385 = vst [vmem:[#allocation7 + $0xc0] sm:$0xff] %v243
    %386 = vst [vmem:[#allocation7 + $0xc8] sm:$0xff] %v245
    %387 = vst [vmem:[#allocation7 + $0xd0] sm:$0xff] %v249
    %388 = vst [vmem:[#allocation7 + $0xd8] sm:$0xff] %v251
    %389 = vst [vmem:[#allocation7 + $0xe0] sm:$0xff] %v255
    %390 = vst [vmem:[#allocation7 + $0xe8] sm:$0xff] %v257
    %391 = vst [vmem:[#allocation7 + $0xf0] sm:$0xff] %v261
    %392 = vst [vmem:[#allocation7 + $0xf8] sm:$0xff] %v263
    %393 = vst [vmem:[#allocation7 + $0x100] sm:$0xff] %v267
    %394 = vst [vmem:[#allocation7 + $0x108] sm:$0xff] %v269
    %395 = vst [vmem:[#allocation7 + $0x110] sm:$0xff] %v273
    %396 = vst [vmem:[#allocation7 + $0x118] sm:$0xff] %v275
    %397 = vst [vmem:[#allocation7 + $0x120] sm:$0xff] %v279
    %398 = vst [vmem:[#allocation7 + $0x128] sm:$0xff] %v281
    %399 = vst [vmem:[#allocation7 + $0x130] sm:$0xff] %v285
    %400 = vst [vmem:[#allocation7 + $0x138] sm:$0xff] %v287
    %401 = vst [vmem:[#allocation7 + $0x140] sm:$0xff] %v291
    %402 = vst [vmem:[#allocation7 + $0x148] sm:$0xff] %v293
    %403 = vst [vmem:[#allocation7 + $0x150] sm:$0xff] %v297
    %404 = vst [vmem:[#allocation7 + $0x158] sm:$0xff] %v299
    %405 = vst [vmem:[#allocation7 + $0x160] sm:$0xff] %v303
    %406 = vst [vmem:[#allocation7 + $0x168] sm:$0xff] %v305
    %407 = vst [vmem:[#allocation7 + $0x170] sm:$0xff] %v309
    %408 = vst [vmem:[#allocation7 + $0x178] sm:$0xff] %v311
    %409 = vst [vmem:[#allocation7 + $0x180] sm:$0xff] %v315
    %410 = vst [vmem:[#allocation7 + $0x188] sm:$0xff] %v317
    %411 = vst [vmem:[#allocation7 + $0x190] sm:$0xff] %v321
    %412 = vst [vmem:[#allocation7 + $0x198] sm:$0xff] %v323
    %413 = vst [vmem:[#allocation7 + $0x1a0] sm:$0xff] %v327
    %414 = vst [vmem:[#allocation7 + $0x1a8] sm:$0xff] %v329
    %415 = vst [vmem:[#allocation7 + $0x1b0] sm:$0xff] %v333
    %416 = vst [vmem:[#allocation7 + $0x1b8] sm:$0xff] %v335
    %417 = vst [vmem:[#allocation7 + $0x1c0] sm:$0xff] %v339
    %418 = vst [vmem:[#allocation7 + $0x1c8] sm:$0xff] %v341
    %419 = vst [vmem:[#allocation7 + $0x1d0] sm:$0xff] %v345
    %420 = vst [vmem:[#allocation7 + $0x1d8] sm:$0xff] %v347
    %421 = vst [vmem:[#allocation7 + $0x1e0] sm:$0xff] %v351
    %422 = vst [vmem:[#allocation7 + $0x1e8] sm:$0xff] %v353
    %423 = vst [vmem:[#allocation7 + $0x1f0] sm:$0xff] %v357
    %424 = vst [vmem:[#allocation7 + $0x1f8] sm:$0xff] %v359
    // Predicated region
    $region18: #{tpu_custom_call.1} parent=1 // pred_check
      _
    $region19: #{tpu_custom_call.1} parent=1 // pred_check_branch
      %426 = sbr.rel (0) target = $region21
    $region20: #{tpu_custom_call.1} parent=1 // pred_region
      %s428 = ssub.s32 8192, 8192
      %429 = vsyncadd [#allocation4], %s428
      %s430 = sshll.u32 [#allocation7], 4
      %s431 = int_to_ptr.vmem [resolvable:$true] %s430
      %436 = dma.vmem_to_hbm [thread:$0]  %s431, 8192, %s2, [#allocation4], 256, 256, 16
    $region21: #{tpu_custom_call.1} parent=1 // pred_fallthru
      _
    // Predicated region
    $region22: #{tpu_custom_call.1} parent=1 // pred_check
      _
    $region23: #{tpu_custom_call.1} parent=1 // pred_check_branch
      %438 = sbr.rel (0) target = $region25
    $region24: #{tpu_custom_call.1} parent=1 // pred_region
      %439 = dma.done [#allocation4], 8192
    $region25: #{tpu_custom_call.1} parent=1 // pred_fallthru
      _
    %440 = vsyncpa [#allocation3], 1
    %441 = vsyncpa [#allocation6], 1
    %442 = vsyncpa [#allocation4], 1

</llo_original>
